<compile_context>
chip_gen: v6e
topology: v6e:2x2x1
jax: 0.10.0
libtpu: 0.0.40
codegen_flags: <defaults>
</compile_context>

<pallas_src>
import jax
import jax.numpy as jnp
from jax.experimental import pallas as pl
from jax.experimental.pallas import tpu as pltpu

# Model dims (input_dim -> 128 -> 256 -> classes), consistent with the module.
INPUT_DIM = 32
HIDDEN1 = 128
HIDDEN2 = 256
CLASSES = 10
BATCH = 8


def _round_up(x, m):
    return (x + m - 1) // m * m


def mlp_kernel(x_ref, w1_ref, b1_ref, w2_ref, b2_ref, w3_ref, b3_ref, o_ref):
    # layer1 = sigmoid(x @ W1 + b1): operands in the weight dtype (bf16 fast path or
    # f32), accumulation always f32; bias add + sigmoid in f32.
    x = x_ref[...].astype(w1_ref.dtype)
    h1 = jax.nn.sigmoid(
        jnp.dot(x, w1_ref[...], preferred_element_type=jnp.float32) + b1_ref[...]
    )
    # layer2 = sigmoid(h1 @ W2 + b2)
    h2 = jax.nn.sigmoid(
        jnp.dot(h1.astype(w2_ref.dtype), w2_ref[...],
                preferred_element_type=jnp.float32) + b2_ref[...]
    )
    # layer3 = h2 @ W3 + b3  (raw logits; 10-lane masked store is negligible vs the
    # saved writeback bytes)
    o_ref[...] = (
        jnp.dot(h2.astype(w3_ref.dtype), w3_ref[...],
                preferred_element_type=jnp.float32) + b3_ref[...]
    ).astype(o_ref.dtype)


def linear_classifier_forward(x, params, tile_b=1024):
    """x: (B, INPUT_DIM) f32. params: dict of (in, out) weights and (1, out) biases
    (weights may be bf16 via prepare_params_bf16). Returns (B, CLASSES) f32 logits,
    identical to the PyTorch forward()."""
    B = x.shape[0]

    # Clamp the batch tile to the sublane-rounded batch; for larger batches cap it
    # so the grid has >= 2 steps (keeps both v7x TensorCores busy, harmless on
    # v5e/v6e). tile_b is always a multiple of 8.
    b8 = _round_up(B, 8)
    tb = min(tile_b, b8)
    if b8 >= 256:
        tb = min(tb, _round_up(-(-B // 2), 8))

    grid = (pl.cdiv(B, tb),)  # ragged last block handled by Pallas masking

    # Weights / biases: full-array blocks with constant index_map -> resident in
    # VMEM across all grid steps. Activations: tiled on batch -> pipelined.
    const = lambda i: (0, 0)
    in_specs = [
        pl.BlockSpec((tb, INPUT_DIM), lambda i: (i, 0)),      # x tile (no K pad)
        pl.BlockSpec((INPUT_DIM, HIDDEN1), const),            # W1
        pl.BlockSpec((1, HIDDEN1), const),                    # b1
        pl.BlockSpec((HIDDEN1, HIDDEN2), const),              # W2
        pl.BlockSpec((1, HIDDEN2), const),                    # b2
        pl.BlockSpec((HIDDEN2, CLASSES), const),              # W3 (no N pad)
        pl.BlockSpec((1, CLASSES), const),                    # b3
    ]
    out_specs = pl.BlockSpec((tb, CLASSES), lambda i: (i, 0))

    return pl.pallas_call(
        mlp_kernel,
        out_shape=jax.ShapeDtypeStruct((B, CLASSES), jnp.float32),
        grid=grid,
        in_specs=in_specs,
        out_specs=out_specs,
        compiler_params=pltpu.CompilerParams(
            dimension_semantics=("parallel",),
        ),
    )(x.astype(jnp.float32), params["w1"], params["b1"], params["w2"],
      params["b2"], params["w3"], params["b3"])


def init_params(key):
    """Deterministic init mimicking nn.Linear's U(-1/sqrt(fan_in), +1/sqrt(fan_in)).
    PyTorch stores weight as (out, in); we store the transpose (in, out)."""
    ks = jax.random.split(key, 6)

    def linear(kw, kb, fan_in, fan_out):
        bound = 1.0 / jnp.sqrt(jnp.float32(fan_in))
        w = jax.random.uniform(kw, (fan_in, fan_out), jnp.float32, -bound, bound)
        b = jax.random.uniform(kb, (1, fan_out), jnp.float32, -bound, bound)
        return w, b

    w1, b1 = linear(ks[0], ks[1], INPUT_DIM, HIDDEN1)
    w2, b2 = linear(ks[2], ks[3], HIDDEN1, HIDDEN2)
    w3, b3 = linear(ks[4], ks[5], HIDDEN2, CLASSES)
    return {"w1": w1, "b1": b1, "w2": w2, "b2": b2, "w3": w3, "b3": b3}


def prepare_params_bf16(params):
    """One-time param prep (do at init, not per forward call): matmul operands in
    bf16 for the MXU fast path on v5e/v6e/v7x; biases stay f32."""
    out = dict(params)
    for k in ("w1", "w2", "w3"):
        out[k] = params[k].astype(jnp.bfloat16)
    return out


def _reference(x, params):
    h1 = jax.nn.sigmoid(x @ params["w1"] + params["b1"])
    h2 = jax.nn.sigmoid(h1 @ params["w2"] + params["b2"])
    return h2 @ params["w3"] + params["b3"]


if __name__ == "__main__":
    key = jax.random.PRNGKey(0)
    k_x, k_x2, k_x3, k_p = jax.random.split(key, 4)

    params = init_params(k_p)

    # f32 path, single-tile call (BATCH=8 -> one grid step of tile_b=8).
    x = jax.random.normal(k_x, (BATCH, INPUT_DIM), jnp.float32)
    out = jax.block_until_ready(linear_classifier_forward(x, params))
    ref = _reference(x, params)
    assert out.shape == (BATCH, CLASSES)
    assert jnp.allclose(out, ref, atol=1e-5, rtol=1e-5)

    # Ragged multi-step grid: B=20 with tile_b=8 -> grid=(3,), last block masked
    # (no batch padding anywhere).
    x2 = jax.random.normal(k_x2, (20, INPUT_DIM), jnp.float32)
    out2 = jax.block_until_ready(linear_classifier_forward(x2, params, tile_b=8))
    ref2 = _reference(x2, params)
    assert out2.shape == (20, CLASSES)
    assert jnp.allclose(out2, ref2, atol=1e-5, rtol=1e-5)

    # bf16-operand fast path (weights prepared once) + the >=2-grid-step clamp:
    # B=272 -> tile_b capped to 136 -> grid=(2,).
    params_bf16 = prepare_params_bf16(params)
    x3 = jax.random.normal(k_x3, (272, INPUT_DIM), jnp.float32)
    out3 = jax.block_until_ready(linear_classifier_forward(x3, params_bf16))
    ref3 = _reference(x3, params)
    assert out3.shape == (272, CLASSES)
    assert jnp.allclose(out3, ref3, atol=5e-2, rtol=5e-2)

    # TODO(synk): learn() (Adam + CrossEntropyLoss training step) is a training-loop
    # concern, out of scope for this forward-pass kernel.
    print("KERNEL_OK")
</pallas_src>

<mosaic_0001>
module attributes {stable_mosaic.version = 11 : i64} {
  func.func @mlp_kernel(%arg0: i32, %arg1: memref<8x32xf32, #tpu.memory_space<vmem>>, %arg2: memref<32x128xf32, #tpu.memory_space<vmem>>, %arg3: memref<1x128xf32, #tpu.memory_space<vmem>>, %arg4: memref<128x256xf32, #tpu.memory_space<vmem>>, %arg5: memref<1x256xf32, #tpu.memory_space<vmem>>, %arg6: memref<256x10xf32, #tpu.memory_space<vmem>>, %arg7: memref<1x10xf32, #tpu.memory_space<vmem>>, %arg8: memref<8x10xf32, #tpu.memory_space<vmem>>) attributes {dimension_semantics = [#tpu.dimension_semantics<parallel>], iteration_bounds = array<i64: 1>, scalar_prefetch = 0 : i64, scratch_operands = 0 : i64, tpu.core_type = #tpu.core_type<tc>, window_params = [{transform_indices = @transform_0, window_bounds = array<i64: 8, 32>}, {pipeline_mode = #tpu.pipeline_mode<synchronous>, transform_indices = @transform_1, window_bounds = array<i64: 32, 128>}, {pipeline_mode = #tpu.pipeline_mode<synchronous>, transform_indices = @transform_2, window_bounds = array<i64: 1, 128>}, {pipeline_mode = #tpu.pipeline_mode<synchronous>, transform_indices = @transform_3, window_bounds = array<i64: 128, 256>}, {pipeline_mode = #tpu.pipeline_mode<synchronous>, transform_indices = @transform_4, window_bounds = array<i64: 1, 256>}, {pipeline_mode = #tpu.pipeline_mode<synchronous>, transform_indices = @transform_5, window_bounds = array<i64: 256, 10>}, {pipeline_mode = #tpu.pipeline_mode<synchronous>, transform_indices = @transform_6, window_bounds = array<i64: 1, 10>}, {transform_indices = @transform_7, window_bounds = array<i64: 8, 10>}]} {
    %c0 = arith.constant 0 : index
    %c0_0 = arith.constant 0 : index
    %0 = vector.load %arg1[%c0, %c0_0] : memref<8x32xf32, #tpu.memory_space<vmem>>, vector<8x32xf32>
    %c0_1 = arith.constant 0 : index
    %c0_2 = arith.constant 0 : index
    %1 = vector.load %arg2[%c0_1, %c0_2] : memref<32x128xf32, #tpu.memory_space<vmem>>, vector<32x128xf32>
    %cst = arith.constant dense<0.000000e+00> : vector<8x128xf32>
    %2 = tpu.matmul %0, %1, %cst {dimension_numbers = #tpu.dot_dimension_numbers<[1], [0], [0], [1], [0, 0, 1, 1], [], []>} : vector<8x32xf32>, vector<32x128xf32>, vector<8x128xf32> -> vector<8x128xf32>
    %c0_3 = arith.constant 0 : index
    %c0_4 = arith.constant 0 : index
    %3 = vector.load %arg3[%c0_3, %c0_4] : memref<1x128xf32, #tpu.memory_space<vmem>>, vector<1x128xf32>
    %4 = vector.broadcast %3 : vector<1x128xf32> to vector<8x128xf32>
    %5 = arith.addf %2, %4 : vector<8x128xf32>
    %6 = arith.negf %5 : vector<8x128xf32>
    %7 = math.exp %6 : vector<8x128xf32>
    %cst_5 = arith.constant 1.000000e+00 : f32
    %8 = vector.broadcast %cst_5 : f32 to vector<8x128xf32>
    %9 = arith.addf %8, %7 : vector<8x128xf32>
    %10 = arith.divf %8, %9 : vector<8x128xf32>
    %c0_6 = arith.constant 0 : index
    %c0_7 = arith.constant 0 : index
    %11 = vector.load %arg4[%c0_6, %c0_7] : memref<128x256xf32, #tpu.memory_space<vmem>>, vector<128x256xf32>
    %cst_8 = arith.constant dense<0.000000e+00> : vector<8x256xf32>
    %12 = tpu.matmul %10, %11, %cst_8 {dimension_numbers = #tpu.dot_dimension_numbers<[1], [0], [0], [1], [0, 0, 1, 1], [], []>} : vector<8x128xf32>, vector<128x256xf32>, vector<8x256xf32> -> vector<8x256xf32>
    %c0_9 = arith.constant 0 : index
    %c0_10 = arith.constant 0 : index
    %13 = vector.load %arg5[%c0_9, %c0_10] : memref<1x256xf32, #tpu.memory_space<vmem>>, vector<1x256xf32>
    %14 = vector.broadcast %13 : vector<1x256xf32> to vector<8x256xf32>
    %15 = arith.addf %12, %14 : vector<8x256xf32>
    %16 = arith.negf %15 : vector<8x256xf32>
    %17 = math.exp %16 : vector<8x256xf32>
    %cst_11 = arith.constant 1.000000e+00 : f32
    %18 = vector.broadcast %cst_11 : f32 to vector<8x256xf32>
    %19 = arith.addf %18, %17 : vector<8x256xf32>
    %20 = arith.divf %18, %19 : vector<8x256xf32>
    %c0_12 = arith.constant 0 : index
    %c0_13 = arith.constant 0 : index
    %21 = vector.load %arg6[%c0_12, %c0_13] : memref<256x10xf32, #tpu.memory_space<vmem>>, vector<256x10xf32>
    %cst_14 = arith.constant dense<0.000000e+00> : vector<8x10xf32>
    %22 = tpu.matmul %20, %21, %cst_14 {dimension_numbers = #tpu.dot_dimension_numbers<[1], [0], [0], [1], [0, 0, 1, 1], [], []>} : vector<8x256xf32>, vector<256x10xf32>, vector<8x10xf32> -> vector<8x10xf32>
    %c0_15 = arith.constant 0 : index
    %c0_16 = arith.constant 0 : index
    %23 = vector.load %arg7[%c0_15, %c0_16] : memref<1x10xf32, #tpu.memory_space<vmem>>, vector<1x10xf32>
    %24 = vector.broadcast %23 : vector<1x10xf32> to vector<8x10xf32>
    %25 = arith.addf %22, %24 : vector<8x10xf32>
    %c0_17 = arith.constant 0 : index
    %c0_18 = arith.constant 0 : index
    %26 = vector.load %arg8[%c0_17, %c0_18] : memref<8x10xf32, #tpu.memory_space<vmem>>, vector<8x10xf32>
    tpu.vector_store %arg8[%c0_17, %c0_18], %25 {strides = array<i32>} : memref<8x10xf32, #tpu.memory_space<vmem>>, vector<8x10xf32>,
    return
  }
  func.func @transform_0(%arg0: i32) -> (i32, i32) {
    %c0_i32 = arith.constant 0 : i32
    %c0_i32_0 = arith.constant 0 : i32
    return %arg0, %c0_i32 : i32, i32
  }
  func.func @transform_1(%arg0: i32) -> (i32, i32) {
    %c0_i32 = arith.constant 0 : i32
    %c0_i32_0 = arith.constant 0 : i32
    %c0_i32_1 = arith.constant 0 : i32
    return %c0_i32, %c0_i32_0 : i32, i32
  }
  func.func @transform_2(%arg0: i32) -> (i32, i32) {
    %c0_i32 = arith.constant 0 : i32
    %c0_i32_0 = arith.constant 0 : i32
    %c0_i32_1 = arith.constant 0 : i32
    return %c0_i32, %c0_i32_0 : i32, i32
  }
  func.func @transform_3(%arg0: i32) -> (i32, i32) {
    %c0_i32 = arith.constant 0 : i32
    %c0_i32_0 = arith.constant 0 : i32
    %c0_i32_1 = arith.constant 0 : i32
    return %c0_i32, %c0_i32_0 : i32, i32
  }
  func.func @transform_4(%arg0: i32) -> (i32, i32) {
    %c0_i32 = arith.constant 0 : i32
    %c0_i32_0 = arith.constant 0 : i32
    %c0_i32_1 = arith.constant 0 : i32
    return %c0_i32, %c0_i32_0 : i32, i32
  }
  func.func @transform_5(%arg0: i32) -> (i32, i32) {
    %c0_i32 = arith.constant 0 : i32
    %c0_i32_0 = arith.constant 0 : i32
    %c0_i32_1 = arith.constant 0 : i32
    return %c0_i32, %c0_i32_0 : i32, i32
  }
  func.func @transform_6(%arg0: i32) -> (i32, i32) {
    %c0_i32 = arith.constant 0 : i32
    %c0_i32_0 = arith.constant 0 : i32
    %c0_i32_1 = arith.constant 0 : i32
    return %c0_i32, %c0_i32_0 : i32, i32
  }
  func.func @transform_7(%arg0: i32) -> (i32, i32) {
    %c0_i32 = arith.constant 0 : i32
    %c0_i32_0 = arith.constant 0 : i32
    return %arg0, %c0_i32 : i32, i32
  }
}

</mosaic_0001>

<llo_original>
// kernel: tpu_custom_call.1
$region0: #{tpu_custom_call.1}
  #allocation0 [shape = 'u32[]', space=smem, size = 0x4, offset = 0x4, fixed_abs, tag = 'smem constant byte address 0x4 - core index']
  #allocation1 [shape = 'u32[144,128]{1,0:T(1,128)}', space=vmem, size = 0x12000, scoped, tag = 'internal scratch']
  %s0 = inlined_call_operand.hbm [shape: f32[8,32], index: 0, kind: input, shape index: {}]
  %s1 = inlined_call_operand.vmem [shape: f32[32,128], index: 1, kind: input, shape index: {}]
  %s2 = inlined_call_operand.vmem [shape: f32[1,128], index: 2, kind: input, shape index: {}]
  %s3 = inlined_call_operand.vmem [shape: f32[128,256], index: 3, kind: input, shape index: {}]
  %s4 = inlined_call_operand.vmem [shape: f32[1,256], index: 4, kind: input, shape index: {}]
  %s5 = inlined_call_operand.vmem [shape: f32[256,10], index: 5, kind: input, shape index: {}]
  %s6 = inlined_call_operand.vmem [shape: f32[1,10], index: 6, kind: input, shape index: {}]
  %s7 = inlined_call_operand.hbm [shape: f32[8,10], index: 7, kind: output, shape index: {}]
  %s8 = sld [smem:[#allocation0]]
  $region42: #{tpu_custom_call.1} parent=0
    _
  %s10 = ssub.s32 1, %s8
  %s11 = scalar_select 0, %s10, %s8
  $region1: #{tpu_custom_call.1} parent=0
    #allocation2 [shape = 'u8[4096]{0}', space=vmem, size = 0x1000, scoped, tag = 'input window, operand 0, single buffered']
    #allocation3 [shape = 's32[1]{0}', space=sflag, size = 0x4, scoped, tag = 'scoped memory for tpu_custom_call.1']
    #allocation4 [shape = 's32[1]{0}', space=sflag, size = 0x4, scoped, tag = 'scoped memory for tpu_custom_call.1']
    #allocation5 [shape = 'u8[4096]{0}', space=vmem, size = 0x1000, scoped, tag = 'output window, operand 0, single buffered']
    %12 = vsyncpa [#allocation3], 0
    %13 = vsyncpa [#allocation4], 0
    // Predicated region
    $region2: #{tpu_custom_call.1} parent=1 // pred_check
      _
    $region3: #{tpu_custom_call.1} parent=1 // pred_check_branch
      %15 = sbr.rel (0) target = $region5
    $region4: #{tpu_custom_call.1} parent=1 // pred_region
      %s17 = ssub.s32 128, 128
      %18 = vsyncadd [#allocation3], %s17
      %s20 = sshll.u32 [#allocation2], 4
      %s21 = int_to_ptr.vmem [resolvable:$true] %s20
      %23 = dma.hbm_to_vmem [thread:$0]  %s0, 128, %s21, [#allocation3]
    $region5: #{tpu_custom_call.1} parent=1 // pred_fallthru
      _
    // Predicated region
    $region6: #{tpu_custom_call.1} parent=1 // pred_check
      _
    $region7: #{tpu_custom_call.1} parent=1 // pred_check_branch
      %25 = sbr.rel (0) target = $region9
    $region8: #{tpu_custom_call.1} parent=1 // pred_region
      _
    $region9: #{tpu_custom_call.1} parent=1 // pred_fallthru
      _
    // Predicated region
    $region10: #{tpu_custom_call.1} parent=1 // pred_check
      _
    $region11: #{tpu_custom_call.1} parent=1 // pred_check_branch
      %27 = sbr.rel (0) target = $region13
    $region12: #{tpu_custom_call.1} parent=1 // pred_region
      _
    $region13: #{tpu_custom_call.1} parent=1 // pred_fallthru
      _
    // Predicated region
    $region14: #{tpu_custom_call.1} parent=1 // pred_check
      _
    $region15: #{tpu_custom_call.1} parent=1 // pred_check_branch
      %29 = sbr.rel (0) target = $region17
    $region16: #{tpu_custom_call.1} parent=1 // pred_region
      _
    $region17: #{tpu_custom_call.1} parent=1 // pred_fallthru
      _
    // Predicated region
    $region18: #{tpu_custom_call.1} parent=1 // pred_check
      _
    $region19: #{tpu_custom_call.1} parent=1 // pred_check_branch
      %31 = sbr.rel (0) target = $region21
    $region20: #{tpu_custom_call.1} parent=1 // pred_region
      _
    $region21: #{tpu_custom_call.1} parent=1 // pred_fallthru
      _
    // Predicated region
    $region22: #{tpu_custom_call.1} parent=1 // pred_check
      _
    $region23: #{tpu_custom_call.1} parent=1 // pred_check_branch
      %33 = sbr.rel (0) target = $region25
    $region24: #{tpu_custom_call.1} parent=1 // pred_region
      _
    $region25: #{tpu_custom_call.1} parent=1 // pred_fallthru
      _
    // Predicated region
    $region26: #{tpu_custom_call.1} parent=1 // pred_check
      _
    $region27: #{tpu_custom_call.1} parent=1 // pred_check_branch
      %35 = sbr.rel (0) target = $region29
    $region28: #{tpu_custom_call.1} parent=1 // pred_region
      _
    $region29: #{tpu_custom_call.1} parent=1 // pred_fallthru
      _
    // Predicated region
    $region30: #{tpu_custom_call.1} parent=1 // pred_check
      _
    $region31: #{tpu_custom_call.1} parent=1 // pred_check_branch
      %37 = sbr.rel (0) target = $region33
    $region32: #{tpu_custom_call.1} parent=1 // pred_region
      %38 = dma.done [#allocation3], 128
    $region33: #{tpu_custom_call.1} parent=1 // pred_fallthru
      _
    %v39 = vld [vmem:[#allocation2] sm:$0xff]
    %v40 = vld [vmem:[%s1] sm:$0xff]
    %v41 = vld [vmem:[%s1 + $0x8] sm:$0xff]
    %v42 = vld [vmem:[%s1 + $0x10] sm:$0xff]
    %v43 = vld [vmem:[%s1 + $0x18] sm:$0xff]
    %v44 = vld [vmem:[%s2] sm:$0x1]
    %v46 = vlaneseq
    %v47 = vshrl.u32 %v46, 7
    %v48 = vsub.s32 0, %v47
    %v49 = vrot.slane %v44, %v48
    %vm51 = vcmask 261120
    %v53 = vsel %vm51, %v39, 0
    %55 = vmatprep.subr.mxu0 0.0
    %56 = vmatpush1.msra.mxu0 0.0
    %57 = vmatprep.subr.mxu0 0.0
    %58 = vmatpush1.msra.mxu0 0.0
    %59 = vmatprep.subr.mxu0 0.0
    %60 = vmatpush1.msra.mxu0 0.0
    %61 = vmatprep.subr.mxu0 0.0
    %62 = vmatpush1.msra.mxu0 0.0
    %63 = vmatprep.subr.mxu0 0.0
    %64 = vmatpush1.msra.mxu0 0.0
    %65 = vmatprep.subr.mxu0 0.0
    %66 = vmatpush1.msra.mxu0 0.0
    %67 = vmatprep.subr.mxu0 0.0
    %68 = vmatpush1.msra.mxu0 0.0
    %69 = vmatprep.subr.mxu0 0.0
    %70 = vmatpush1.msra.mxu0 0.0
    %71 = vmatprep.subr.mxu0 0.0
    %72 = vmatpush1.msra.mxu0 0.0
    %73 = vmatprep.subr.mxu0 0.0
    %74 = vmatpush1.msra.mxu0 0.0
    %75 = vmatprep.subr.mxu0 0.0
    %76 = vmatpush1.msra.mxu0 0.0
    %77 = vmatprep.subr.mxu0 0.0
    %78 = vmatpush1.msra.mxu0 0.0
    %79 = vmatprep.subr.mxu0 0.0
    %80 = vmatpush1.msra.mxu0 %v43
    %81 = vmatprep.subr.mxu0 0.0
    %82 = vmatpush1.msra.mxu0 %v42
    %83 = vmatprep.subr.mxu0 0.0
    %84 = vmatpush1.msra.mxu0 %v41
    %85 = vmatprep.subr.mxu0 0.0
    %86 = vmatpush1.msra.mxu0 %v40
    %87 = vmatprep.subr.mxu0 0.0
    %88 = vmatpush2.msra.mxu0 0.0
    %89 = vmatprep.subr.mxu0 0.0
    %90 = vmatpush2.msra.mxu0 0.0
    %91 = vmatprep.subr.mxu0 0.0
    %92 = vmatpush2.msra.mxu0 0.0
    %93 = vmatprep.subr.mxu0 0.0
    %94 = vmatpush2.msra.mxu0 0.0
    %95 = vmatprep.subr.mxu0 0.0
    %96 = vmatpush2.msra.mxu0 0.0
    %97 = vmatprep.subr.mxu0 0.0
    %98 = vmatpush2.msra.mxu0 0.0
    %99 = vmatprep.subr.mxu0 0.0
    %100 = vmatpush2.msra.mxu0 0.0
    %101 = vmatprep.subr.mxu0 0.0
    %102 = vmatpush2.msra.mxu0 0.0
    %103 = vmatprep.subr.mxu0 0.0
    %104 = vmatpush2.msra.mxu0 0.0
    %105 = vmatprep.subr.mxu0 0.0
    %106 = vmatpush2.msra.mxu0 0.0
    %107 = vmatprep.subr.mxu0 0.0
    %108 = vmatpush2.msra.mxu0 0.0
    %109 = vmatprep.subr.mxu0 0.0
    %110 = vmatpush2.msra.mxu0 0.0
    %111 = vmatprep.subr.mxu0 0.0
    %112 = vmatpush2.msra.mxu0 0.0
    %113 = vmatprep.subr.mxu0 0.0
    %114 = vmatpush2.msra.mxu0 0.0
    %115 = vmatprep.subr.mxu0 0.0
    %116 = vmatpush2.msra.mxu0 0.0
    %117 = vmatprep.subr.mxu0 0.0
    %118 = vmatpush2.msra.mxu0 0.0
    %119 = vmatprep.mubr.f32.mxu0 0.0
    %120 = vmatmul.mubr.f32.gmra.mxu0 %v53
    %v121 = vpop.f32.mrf.mxu0
    %v122 = vadd.f32 %v49, %v121
    %v123 = vpop.f32.mrf.mxu0
    %124 = vdwg.mxu0
    %v125 = vxor.u32 %v122, 2147483648
    %v126 = vmul.f32 %v125, 1.442695
    %v127 = vpow.pop %v126
    %v128 = vadd.f32 %v127, 1.0
    %v129 = vrcp.pop %v128
    %v130 = vmul.f32 1.0, %v129
    %v131 = vld [vmem:[%s3] sm:$0xff]
    %v132 = vld [vmem:[%s3 + $0x8] sm:$0xff]
    %v133 = vld [vmem:[%s3 + $0x10] sm:$0xff]
    %v134 = vld [vmem:[%s3 + $0x18] sm:$0xff]
    %v135 = vld [vmem:[%s3 + $0x20] sm:$0xff]
    %v136 = vld [vmem:[%s3 + $0x28] sm:$0xff]
    %v137 = vld [vmem:[%s3 + $0x30] sm:$0xff]
    %v138 = vld [vmem:[%s3 + $0x38] sm:$0xff]
    %v139 = vld [vmem:[%s3 + $0x40] sm:$0xff]
    %v140 = vld [vmem:[%s3 + $0x48] sm:$0xff]
    %v141 = vld [vmem:[%s3 + $0x50] sm:$0xff]
    %v142 = vld [vmem:[%s3 + $0x58] sm:$0xff]
    %v143 = vld [vmem:[%s3 + $0x60] sm:$0xff]
    %v144 = vld [vmem:[%s3 + $0x68] sm:$0xff]
    %v145 = vld [vmem:[%s3 + $0x70] sm:$0xff]
    %v146 = vld [vmem:[%s3 + $0x78] sm:$0xff]
    %v147 = vld [vmem:[%s3 + $0x80] sm:$0xff]
    %v148 = vld [vmem:[%s3 + $0x88] sm:$0xff]
    %v149 = vld [vmem:[%s3 + $0x90] sm:$0xff]
    %v150 = vld [vmem:[%s3 + $0x98] sm:$0xff]
    %v151 = vld [vmem:[%s3 + $0xa0] sm:$0xff]
    %v152 = vld [vmem:[%s3 + $0xa8] sm:$0xff]
    %v153 = vld [vmem:[%s3 + $0xb0] sm:$0xff]
    %v154 = vld [vmem:[%s3 + $0xb8] sm:$0xff]
    %v155 = vld [vmem:[%s3 + $0xc0] sm:$0xff]
    %v156 = vld [vmem:[%s3 + $0xc8] sm:$0xff]
    %v157 = vld [vmem:[%s3 + $0xd0] sm:$0xff]
    %v158 = vld [vmem:[%s3 + $0xd8] sm:$0xff]
    %v159 = vld [vmem:[%s3 + $0xe0] sm:$0xff]
    %v160 = vld [vmem:[%s3 + $0xe8] sm:$0xff]
    %v161 = vld [vmem:[%s3 + $0xf0] sm:$0xff]
    %v162 = vld [vmem:[%s3 + $0xf8] sm:$0xff]
    %v163 = vld [vmem:[%s4] sm:$0x3]
    %v165 = vlaneseq
    %v166 = vshrl.u32 %v165, 7
    %v167 = vsub.s32 0, %v166
    %v168 = vrot.slane %v163, %v167
    %v169 = vlaneseq
    %v170 = vshrl.u32 %v169, 7
    %v171 = vsub.s32 1, %v170
    %v172 = vrot.slane %v163, %v171
    %175 = vmatprep.subr.mxu0 %v162
    %176 = vmatpush1.msra.mxu0 %v161
    %177 = vmatprep.subr.mxu0 %v160
    %178 = vmatpush1.msra.mxu0 %v159
    %179 = vmatprep.subr.mxu0 %v158
    %180 = vmatpush1.msra.mxu0 %v157
    %181 = vmatprep.subr.mxu0 %v156
    %182 = vmatpush1.msra.mxu0 %v155
    %183 = vmatprep.subr.mxu0 %v154
    %184 = vmatpush1.msra.mxu0 %v153
    %185 = vmatprep.subr.mxu0 %v152
    %186 = vmatpush1.msra.mxu0 %v151
    %187 = vmatprep.subr.mxu0 %v150
    %188 = vmatpush1.msra.mxu0 %v149
    %189 = vmatprep.subr.mxu0 %v148
    %190 = vmatpush1.msra.mxu0 %v147
    %191 = vmatprep.subr.mxu0 %v146
    %192 = vmatpush1.msra.mxu0 %v145
    %193 = vmatprep.subr.mxu0 %v144
    %194 = vmatpush1.msra.mxu0 %v143
    %195 = vmatprep.subr.mxu0 %v142
    %196 = vmatpush1.msra.mxu0 %v141
    %197 = vmatprep.subr.mxu0 %v140
    %198 = vmatpush1.msra.mxu0 %v139
    %199 = vmatprep.subr.mxu0 %v138
    %200 = vmatpush1.msra.mxu0 %v137
    %201 = vmatprep.subr.mxu0 %v136
    %202 = vmatpush1.msra.mxu0 %v135
    %203 = vmatprep.subr.mxu0 %v134
    %204 = vmatpush1.msra.mxu0 %v133
    %205 = vmatprep.subr.mxu0 %v132
    %206 = vmatpush1.msra.mxu0 %v131
    %207 = vmatprep.subr.mxu0 0.0
    %208 = vmatpush2.msra.mxu0 0.0
    %209 = vmatprep.subr.mxu0 0.0
    %210 = vmatpush2.msra.mxu0 0.0
    %211 = vmatprep.subr.mxu0 0.0
    %212 = vmatpush2.msra.mxu0 0.0
    %213 = vmatprep.subr.mxu0 0.0
    %214 = vmatpush2.msra.mxu0 0.0
    %215 = vmatprep.subr.mxu0 0.0
    %216 = vmatpush2.msra.mxu0 0.0
    %217 = vmatprep.subr.mxu0 0.0
    %218 = vmatpush2.msra.mxu0 0.0
    %219 = vmatprep.subr.mxu0 0.0
    %220 = vmatpush2.msra.mxu0 0.0
    %221 = vmatprep.subr.mxu0 0.0
    %222 = vmatpush2.msra.mxu0 0.0
    %223 = vmatprep.subr.mxu0 0.0
    %224 = vmatpush2.msra.mxu0 0.0
    %225 = vmatprep.subr.mxu0 0.0
    %226 = vmatpush2.msra.mxu0 0.0
    %227 = vmatprep.subr.mxu0 0.0
    %228 = vmatpush2.msra.mxu0 0.0
    %229 = vmatprep.subr.mxu0 0.0
    %230 = vmatpush2.msra.mxu0 0.0
    %231 = vmatprep.subr.mxu0 0.0
    %232 = vmatpush2.msra.mxu0 0.0
    %233 = vmatprep.subr.mxu0 0.0
    %234 = vmatpush2.msra.mxu0 0.0
    %235 = vmatprep.subr.mxu0 0.0
    %236 = vmatpush2.msra.mxu0 0.0
    %237 = vmatprep.subr.mxu0 0.0
    %238 = vmatpush2.msra.mxu0 0.0
    %239 = vmatprep.mubr.f32.mxu0 0.0
    %240 = vmatmul.mubr.f32.gmra.mxu0 %v130
    %v241 = vpop.f32.mrf.mxu0
    %v242 = vadd.f32 %v168, %v241
    %v243 = vpop.f32.mrf.mxu0
    %v244 = vadd.f32 %v172, %v243
    %245 = vdwg.mxu0
    %v246 = vxor.u32 %v242, 2147483648
    %v247 = vxor.u32 %v244, 2147483648
    %v248 = vmul.f32 %v246, 1.442695
    %v249 = vpow.pop %v248
    %v250 = vmul.f32 %v247, 1.442695
    %v251 = vpow.pop %v250
    %v252 = vadd.f32 %v249, 1.0
    %v253 = vadd.f32 %v251, 1.0
    %v254 = vrcp.pop %v252
    %v255 = vmul.f32 1.0, %v254
    %v256 = vrcp.pop %v253
    %v257 = vmul.f32 1.0, %v256
    %v258 = vld [vmem:[%s5] sm:$0xff]
    %v259 = vld [vmem:[%s5 + $0x8] sm:$0xff]
    %v260 = vld [vmem:[%s5 + $0x10] sm:$0xff]
    %v261 = vld [vmem:[%s5 + $0x18] sm:$0xff]
    %v262 = vld [vmem:[%s5 + $0x20] sm:$0xff]
    %v263 = vld [vmem:[%s5 + $0x28] sm:$0xff]
    %v264 = vld [vmem:[%s5 + $0x30] sm:$0xff]
    %v265 = vld [vmem:[%s5 + $0x38] sm:$0xff]
    %v266 = vld [vmem:[%s5 + $0x40] sm:$0xff]
    %v267 = vld [vmem:[%s5 + $0x48] sm:$0xff]
    %v268 = vld [vmem:[%s5 + $0x50] sm:$0xff]
    %v269 = vld [vmem:[%s5 + $0x58] sm:$0xff]
    %v270 = vld [vmem:[%s5 + $0x60] sm:$0xff]
    %v271 = vld [vmem:[%s5 + $0x68] sm:$0xff]
    %v272 = vld [vmem:[%s5 + $0x70] sm:$0xff]
    %v273 = vld [vmem:[%s5 + $0x78] sm:$0xff]
    %v274 = vld [vmem:[%s5 + $0x80] sm:$0xff]
    %v275 = vld [vmem:[%s5 + $0x88] sm:$0xff]
    %v276 = vld [vmem:[%s5 + $0x90] sm:$0xff]
    %v277 = vld [vmem:[%s5 + $0x98] sm:$0xff]
    %v278 = vld [vmem:[%s5 + $0xa0] sm:$0xff]
    %v279 = vld [vmem:[%s5 + $0xa8] sm:$0xff]
    %v280 = vld [vmem:[%s5 + $0xb0] sm:$0xff]
    %v281 = vld [vmem:[%s5 + $0xb8] sm:$0xff]
    %v282 = vld [vmem:[%s5 + $0xc0] sm:$0xff]
    %v283 = vld [vmem:[%s5 + $0xc8] sm:$0xff]
    %v284 = vld [vmem:[%s5 + $0xd0] sm:$0xff]
    %v285 = vld [vmem:[%s5 + $0xd8] sm:$0xff]
    %v286 = vld [vmem:[%s5 + $0xe0] sm:$0xff]
    %v287 = vld [vmem:[%s5 + $0xe8] sm:$0xff]
    %v288 = vld [vmem:[%s5 + $0xf0] sm:$0xff]
    %v289 = vld [vmem:[%s5 + $0xf8] sm:$0xff]
    %v290 = vld [vmem:[%s6] sm:$0x1]
    %v292 = vlaneseq
    %v293 = vshrl.u32 %v292, 7
    %v294 = vsub.s32 0, %v293
    %v295 = vrot.slane %v290, %v294
    %297 = vmatprep.subr.mxu0 0.0
    %298 = vmatpush1.msra.mxu0 %v273
    %299 = vmatprep.subr.mxu0 0.0
    %300 = vmatpush1.msra.mxu0 %v272
    %301 = vmatprep.subr.mxu0 0.0
    %302 = vmatpush1.msra.mxu0 %v271
    %303 = vmatprep.subr.mxu0 0.0
    %304 = vmatpush1.msra.mxu0 %v270
    %305 = vmatprep.subr.mxu0 0.0
    %306 = vmatpush1.msra.mxu0 %v269
    %307 = vmatprep.subr.mxu0 0.0
    %308 = vmatpush1.msra.mxu0 %v268
    %309 = vmatprep.subr.mxu0 0.0
    %310 = vmatpush1.msra.mxu0 %v267
    %311 = vmatprep.subr.mxu0 0.0
    %312 = vmatpush1.msra.mxu0 %v266
    %313 = vmatprep.subr.mxu0 0.0
    %314 = vmatpush1.msra.mxu0 %v265
    %315 = vmatprep.subr.mxu0 0.0
    %316 = vmatpush1.msra.mxu0 %v264
    %317 = vmatprep.subr.mxu0 0.0
    %318 = vmatpush1.msra.mxu0 %v263
    %319 = vmatprep.subr.mxu0 0.0
    %320 = vmatpush1.msra.mxu0 %v262
    %321 = vmatprep.subr.mxu0 0.0
    %322 = vmatpush1.msra.mxu0 %v261
    %323 = vmatprep.subr.mxu0 0.0
    %324 = vmatpush1.msra.mxu0 %v260
    %325 = vmatprep.subr.mxu0 0.0
    %326 = vmatpush1.msra.mxu0 %v259
    %327 = vmatprep.subr.mxu0 0.0
    %328 = vmatpush1.msra.mxu0 %v258
    %329 = vmatprep.subr.mxu0 0.0
    %330 = vmatpush2.msra.mxu0 %v289
    %331 = vmatprep.subr.mxu0 0.0
    %332 = vmatpush2.msra.mxu0 %v288
    %333 = vmatprep.subr.mxu0 0.0
    %334 = vmatpush2.msra.mxu0 %v287
    %335 = vmatprep.subr.mxu0 0.0
    %336 = vmatpush2.msra.mxu0 %v286
    %337 = vmatprep.subr.mxu0 0.0
    %338 = vmatpush2.msra.mxu0 %v285
    %339 = vmatprep.subr.mxu0 0.0
    %340 = vmatpush2.msra.mxu0 %v284
    %341 = vmatprep.subr.mxu0 0.0
    %342 = vmatpush2.msra.mxu0 %v283
    %343 = vmatprep.subr.mxu0 0.0
    %344 = vmatpush2.msra.mxu0 %v282
    %345 = vmatprep.subr.mxu0 0.0
    %346 = vmatpush2.msra.mxu0 %v281
    %347 = vmatprep.subr.mxu0 0.0
    %348 = vmatpush2.msra.mxu0 %v280
    %349 = vmatprep.subr.mxu0 0.0
    %350 = vmatpush2.msra.mxu0 %v279
    %351 = vmatprep.subr.mxu0 0.0
    %352 = vmatpush2.msra.mxu0 %v278
    %353 = vmatprep.subr.mxu0 0.0
    %354 = vmatpush2.msra.mxu0 %v277
    %355 = vmatprep.subr.mxu0 0.0
    %356 = vmatpush2.msra.mxu0 %v276
    %357 = vmatprep.subr.mxu0 0.0
    %358 = vmatpush2.msra.mxu0 %v275
    %359 = vmatprep.subr.mxu0 0.0
    %360 = vmatpush2.msra.mxu0 %v274
    %361 = vmatprep.mubr.f32.mxu0 %v257
    %362 = vmatmul.mubr.f32.gmra.mxu0 %v255
    %v363 = vpop.f32.mrf.mxu0
    %v364 = vadd.f32 %v295, %v363
    %v365 = vpop.f32.mrf.mxu0
    %366 = vdwg.mxu0
    %vm367 = vcmask 80896
    %368 = vst.msk [vmem:[#allocation5] sm:$0xff] %vm367, %v364
    // Predicated region
    $region34: #{tpu_custom_call.1} parent=1 // pred_check
      _
    $region35: #{tpu_custom_call.1} parent=1 // pred_check_branch
      %370 = sbr.rel (0) target = $region37
    $region36: #{tpu_custom_call.1} parent=1 // pred_region
      %s372 = ssub.s32 128, 128
      %373 = vsyncadd [#allocation4], %s372
      %s375 = sshll.u32 [#allocation5], 4
      %s376 = int_to_ptr.vmem [resolvable:$true] %s375
      %378 = dma.vmem_to_hbm [thread:$0]  %s376, 128, %s7, [#allocation4]
    $region37: #{tpu_custom_call.1} parent=1 // pred_fallthru
      _
    // Predicated region
    $region38: #{tpu_custom_call.1} parent=1 // pred_check
      _
    $region39: #{tpu_custom_call.1} parent=1 // pred_check_branch
      %380 = sbr.rel (0) target = $region41
    $region40: #{tpu_custom_call.1} parent=1 // pred_region
      %381 = dma.done [#allocation4], 128
    $region41: #{tpu_custom_call.1} parent=1 // pred_fallthru
      _
    %382 = vsyncpa [#allocation3], 1
    %383 = vsyncpa [#allocation4], 1

</llo_original>
